<compile_context>
chip_gen: v7x
topology: tpu7x:2x2x1
jax: 0.10.0
libtpu: 0.0.40
codegen_flags: <defaults>
</compile_context>

<pallas_src>
import jax
import jax.numpy as jnp
from jax.experimental import pallas as pl
from jax.experimental.pallas import tpu as pltpu


def _round_up(v: int, m: int) -> int:
    return ((v + m - 1) // m) * m


def _diag_gaussian_mean_kernel(x_ref, w_ref, b_ref, meant_ref):
    """meant (N, TB) = W (N, K) @ x_blk (TB, K)^T + b (N, 1)."""
    acc = jax.lax.dot_general(
        w_ref[...],                      # (N, K)
        x_ref[...],                      # (TB, K)
        dimension_numbers=(((1,), (1,)), ((), ())),   # contract K on both => W @ x^T
        preferred_element_type=jnp.float32,
    )                                    # (N, TB), batch on the lane axis -> dense stores
    meant_ref[...] = (acc + b_ref[...]).astype(meant_ref.dtype)


def diag_gaussian_forward(x, weight, bias, logstd, *, tile_b: int = 512):
    """DiagGaussian forward.

    x:      (B, num_inputs)            float32
    weight: (num_outputs, num_inputs)  PyTorch Linear layout (orthogonal init)
    bias:   (num_outputs,)             Linear bias (init 0)
    logstd: (num_outputs,)             AddBias parameter (init 0)

    Returns (mean, std), each (B, num_outputs) float32 — the FixedNormal parameters.
    """
    B, K = x.shape
    N = weight.shape[0]
    out_dtype = jnp.float32  # match PyTorch f32 Linear output explicitly

    # Batch tile sits on the output's lane axis -> must be a multiple of 128.
    TB = min(int(tile_b), _round_up(B, 128))
    TB = _round_up(TB, 128)
    B_pad = _round_up(B, TB)
    if B_pad != B:
        x = jnp.pad(x, ((0, B_pad - B), (0, 0)))

    b_col = bias.reshape(N, 1).astype(jnp.float32)
    grid = (B_pad // TB,)

    mean_t = pl.pallas_call(
        _diag_gaussian_mean_kernel,
        out_shape=jax.ShapeDtypeStruct((N, B_pad), out_dtype),
        grid=grid,
        in_specs=[
            pl.BlockSpec((TB, K), lambda i: (i, 0)),   # x batch tile (natural layout)
            pl.BlockSpec((N, K), lambda i: (0, 0)),    # weight, resident across tiles
            pl.BlockSpec((N, 1), lambda i: (0, 0)),    # bias column, resident
        ],
        out_specs=pl.BlockSpec((N, TB), lambda i: (0, i)),  # lane-dense mean^T tile
        compiler_params=pltpu.CompilerParams(
            dimension_semantics=("parallel",),  # independent batch tiles (2 TCs on v7x)
        ),
    )(x.astype(jnp.float32), weight.astype(jnp.float32), b_col)

    mean = mean_t[:, :B].T  # back to (B, N); wrapper-side layout plumbing only

    # std = exp(0 + logstd) is a single (N,) row; compute in plain JAX instead of
    # writing a redundant (B, N) tensor from the kernel.
    std = jnp.broadcast_to(jnp.exp(logstd.astype(jnp.float32))[None, :], (B, N))
    return mean, std


def make_params(key, num_inputs, num_outputs, dtype=jnp.float32):
    """Matches DiagGaussian.__init__: orthogonal weight (gain=1), zero bias, zero logstd.
    Weight is kept in the PyTorch-native (num_outputs, num_inputs) layout."""
    weight = jax.nn.initializers.orthogonal(scale=1.0)(
        key, (num_outputs, num_inputs), dtype)
    bias = jnp.zeros((num_outputs,), dtype)
    logstd = jnp.zeros((num_outputs,), dtype)
    return weight, bias, logstd


def _reference(x, weight, bias, logstd):
    ref_mean = x @ weight.T + bias[None, :]
    ref_std = jnp.broadcast_to(jnp.exp(logstd)[None, :], ref_mean.shape)
    return ref_mean, ref_std


if __name__ == "__main__":
    key = jax.random.PRNGKey(0)
    k_x, k_w, k_x2, k_b, k_ls = jax.random.split(key, 5)

    num_inputs, num_outputs = 32, 8
    weight, bias, logstd = make_params(k_w, num_inputs, num_outputs)

    fwd = jax.jit(diag_gaussian_forward)

    # --- small case (module-default params: zero bias / zero logstd) ---
    x_small = jax.random.normal(k_x, (2, num_inputs), jnp.float32)
    mean, std = fwd(x_small, weight, bias, logstd)
    jax.block_until_ready((mean, std))
    ref_mean, ref_std = _reference(x_small, weight, bias, logstd)
    assert mean.shape == (2, num_outputs) and std.shape == (2, num_outputs)
    assert jnp.allclose(mean, ref_mean, atol=1e-4, rtol=1e-4)
    assert jnp.allclose(std, ref_std, atol=1e-6, rtol=1e-6)

    # --- larger, non-multiple batch with nonzero params: exercises the batch grid
    #     (multiple tiles), padding path, bias add and exp(logstd) broadcast ---
    x_big = jax.random.normal(k_x2, (1030, num_inputs), jnp.float32)
    bias2 = 0.1 * jax.random.normal(k_b, (num_outputs,), jnp.float32)
    logstd2 = 0.1 * jax.random.normal(k_ls, (num_outputs,), jnp.float32)
    mean_b, std_b = fwd(x_big, weight, bias2, logstd2)
    jax.block_until_ready((mean_b, std_b))
    ref_mean_b, ref_std_b = _reference(x_big, weight, bias2, logstd2)
    assert mean_b.shape == (1030, num_outputs) and std_b.shape == (1030, num_outputs)
    assert jnp.allclose(mean_b, ref_mean_b, atol=1e-4, rtol=1e-4)
    assert jnp.allclose(std_b, ref_std_b, atol=1e-6, rtol=1e-6)

    print("KERNEL_OK")
</pallas_src>

<mosaic_0001>
module attributes {stable_mosaic.version = 11 : i64} {
  func.func @_diag_gaussian_mean_kernel(%arg0: i32, %arg1: memref<128x32xf32, #tpu.memory_space<vmem>>, %arg2: memref<8x32xf32, #tpu.memory_space<vmem>>, %arg3: memref<8x1xf32, #tpu.memory_space<vmem>>, %arg4: memref<8x128xf32, #tpu.memory_space<vmem>>) attributes {dimension_semantics = [#tpu.dimension_semantics<parallel>], iteration_bounds = array<i64: 1>, scalar_prefetch = 0 : i64, scratch_operands = 0 : i64, tpu.core_type = #tpu.core_type<tc>, window_params = [{transform_indices = @transform_0, window_bounds = array<i64: 128, 32>}, {pipeline_mode = #tpu.pipeline_mode<synchronous>, transform_indices = @transform_1, window_bounds = array<i64: 8, 32>}, {pipeline_mode = #tpu.pipeline_mode<synchronous>, transform_indices = @transform_2, window_bounds = array<i64: 8, 1>}, {transform_indices = @transform_3, window_bounds = array<i64: 8, 128>}]} {
    %c0 = arith.constant 0 : index
    %c0_0 = arith.constant 0 : index
    %0 = vector.load %arg2[%c0, %c0_0] : memref<8x32xf32, #tpu.memory_space<vmem>>, vector<8x32xf32>
    %c0_1 = arith.constant 0 : index
    %c0_2 = arith.constant 0 : index
    %1 = vector.load %arg1[%c0_1, %c0_2] : memref<128x32xf32, #tpu.memory_space<vmem>>, vector<128x32xf32>
    %cst = arith.constant dense<0.000000e+00> : vector<8x128xf32>
    %2 = tpu.matmul %0, %1, %cst {dimension_numbers = #tpu.dot_dimension_numbers<[1], [1], [0], [0], [0, 0, 1, 0], [], []>} : vector<8x32xf32>, vector<128x32xf32>, vector<8x128xf32> -> vector<8x128xf32>
    %c0_3 = arith.constant 0 : index
    %c0_4 = arith.constant 0 : index
    %3 = vector.load %arg3[%c0_3, %c0_4] : memref<8x1xf32, #tpu.memory_space<vmem>>, vector<8x1xf32>
    %4 = vector.broadcast %3 : vector<8x1xf32> to vector<8x128xf32>
    %5 = arith.addf %2, %4 : vector<8x128xf32>
    %c0_5 = arith.constant 0 : index
    %c0_6 = arith.constant 0 : index
    %6 = vector.load %arg4[%c0_5, %c0_6] : memref<8x128xf32, #tpu.memory_space<vmem>>, vector<8x128xf32>
    tpu.vector_store %arg4[%c0_5, %c0_6], %5 {strides = array<i32>} : memref<8x128xf32, #tpu.memory_space<vmem>>, vector<8x128xf32>,
    return
  }
  func.func @transform_0(%arg0: i32) -> (i32, i32) {
    %c0_i32 = arith.constant 0 : i32
    %c0_i32_0 = arith.constant 0 : i32
    return %arg0, %c0_i32 : i32, i32
  }
  func.func @transform_1(%arg0: i32) -> (i32, i32) {
    %c0_i32 = arith.constant 0 : i32
    %c0_i32_0 = arith.constant 0 : i32
    %c0_i32_1 = arith.constant 0 : i32
    return %c0_i32, %c0_i32_0 : i32, i32
  }
  func.func @transform_2(%arg0: i32) -> (i32, i32) {
    %c0_i32 = arith.constant 0 : i32
    %c0_i32_0 = arith.constant 0 : i32
    %c0_i32_1 = arith.constant 0 : i32
    return %c0_i32, %c0_i32_0 : i32, i32
  }
  func.func @transform_3(%arg0: i32) -> (i32, i32) {
    %c0_i32 = arith.constant 0 : i32
    %c0_i32_0 = arith.constant 0 : i32
    return %c0_i32, %arg0 : i32, i32
  }
}

</mosaic_0001>

<llo_original>
// kernel: diag_gaussian_forward.1
$region0: #{diag_gaussian_forward.1}
  #allocation0 [shape = 'u32[]', space=smem, size = 0x4, offset = 0x4, fixed_abs, tag = 'smem constant byte address 0x4 - core index']
  #allocation1 [shape = 'u32[144,128]{1,0:T(1,128)}', space=vmem, size = 0x12000, scoped, tag = 'internal scratch']
  %s0 = inlined_call_operand.vmem [shape: f32[128,32], index: 0, kind: input, shape index: {}]
  %s1 = inlined_call_operand.vmem [shape: f32[8,32], index: 1, kind: input, shape index: {}]
  %s2 = inlined_call_operand.vmem [shape: f32[8,1], index: 2, kind: input, shape index: {}]
  %s3 = inlined_call_operand.vmem [shape: f32[8,128], index: 3, kind: output, shape index: {}]
  %s4 = sld [smem:[#allocation0]]
  $region22: #{diag_gaussian_forward.1} parent=0
    _
  %s6 = ssub.s32 1, %s4
  %s7 = scalar_select 0, %s6, %s4
  // Predicated region
  $region2: #{diag_gaussian_forward.1} parent=0 // pred_check
    _
  $region3: #{diag_gaussian_forward.1} parent=0 // pred_check_branch
    %9 = sbr.rel (0) target = $region5
  $region4: #{diag_gaussian_forward.1} parent=0 // pred_region
    _
  $region5: #{diag_gaussian_forward.1} parent=0 // pred_fallthru
    _
  // Predicated region
  $region6: #{diag_gaussian_forward.1} parent=0 // pred_check
    _
  $region7: #{diag_gaussian_forward.1} parent=0 // pred_check_branch
    %11 = sbr.rel (0) target = $region9
  $region8: #{diag_gaussian_forward.1} parent=0 // pred_region
    _
  $region9: #{diag_gaussian_forward.1} parent=0 // pred_fallthru
    _
  // Predicated region
  $region10: #{diag_gaussian_forward.1} parent=0 // pred_check
    _
  $region11: #{diag_gaussian_forward.1} parent=0 // pred_check_branch
    %13 = sbr.rel (0) target = $region13
  $region12: #{diag_gaussian_forward.1} parent=0 // pred_region
    _
  $region13: #{diag_gaussian_forward.1} parent=0 // pred_fallthru
    _
  %v14 = vld [vmem:[%s1] sm:$0xff]
  %v15 = vld [vmem:[%s0] sm:$0xff]
  %v16 = vld [vmem:[%s0 + $0x8] sm:$0xff]
  %v17 = vld [vmem:[%s0 + $0x10] sm:$0xff]
  %v18 = vld [vmem:[%s0 + $0x18] sm:$0xff]
  %v19 = vld [vmem:[%s0 + $0x20] sm:$0xff]
  %v20 = vld [vmem:[%s0 + $0x28] sm:$0xff]
  %v21 = vld [vmem:[%s0 + $0x30] sm:$0xff]
  %v22 = vld [vmem:[%s0 + $0x38] sm:$0xff]
  %v23 = vld [vmem:[%s0 + $0x40] sm:$0xff]
  %v24 = vld [vmem:[%s0 + $0x48] sm:$0xff]
  %v25 = vld [vmem:[%s0 + $0x50] sm:$0xff]
  %v26 = vld [vmem:[%s0 + $0x58] sm:$0xff]
  %v27 = vld [vmem:[%s0 + $0x60] sm:$0xff]
  %v28 = vld [vmem:[%s0 + $0x68] sm:$0xff]
  %v29 = vld [vmem:[%s0 + $0x70] sm:$0xff]
  %v30 = vld [vmem:[%s0 + $0x78] sm:$0xff]
  %v31 = vld [vmem:[%s2] sm:$0xff]
  %33 = vset.pattern.permute.xlu0 0
  %34 = vperm.xlu0 %33, %v31
  %v35 = vpop.permute.xlu0 %34
  %vm37 = vcmask 261120
  %v39 = vsel %vm37, %v14, 0
  %v42 = vsel %vm37, %v15, 0
  %v45 = vsel %vm37, %v16, 0
  %v48 = vsel %vm37, %v17, 0
  %v51 = vsel %vm37, %v18, 0
  %v54 = vsel %vm37, %v19, 0
  %v57 = vsel %vm37, %v20, 0
  %v60 = vsel %vm37, %v21, 0
  %v63 = vsel %vm37, %v22, 0
  %v66 = vsel %vm37, %v23, 0
  %v69 = vsel %vm37, %v24, 0
  %v72 = vsel %vm37, %v25, 0
  %v75 = vsel %vm37, %v26, 0
  %v78 = vsel %vm37, %v27, 0
  %v81 = vsel %vm37, %v28, 0
  %v84 = vsel %vm37, %v29, 0
  %v87 = vsel %vm37, %v30, 0
  %89 = vmatprep.subr.mxu0 0.0
  %90 = vmatpush1.xpose.msra.mxu0 %v42
  %91 = vmatprep.subr.mxu0 0.0
  %92 = vmatpush1.xpose.msra.mxu0 %v45
  %93 = vmatprep.subr.mxu0 0.0
  %94 = vmatpush1.xpose.msra.mxu0 %v48
  %95 = vmatprep.subr.mxu0 0.0
  %96 = vmatpush1.xpose.msra.mxu0 %v51
  %97 = vmatprep.subr.mxu0 0.0
  %98 = vmatpush1.xpose.msra.mxu0 %v54
  %99 = vmatprep.subr.mxu0 0.0
  %100 = vmatpush1.xpose.msra.mxu0 %v57
  %101 = vmatprep.subr.mxu0 0.0
  %102 = vmatpush1.xpose.msra.mxu0 %v60
  %103 = vmatprep.subr.mxu0 0.0
  %104 = vmatpush1.xpose.msra.mxu0 %v63
  %105 = vmatprep.subr.mxu0 0.0
  %106 = vmatpush1.xpose.msra.mxu0 %v66
  %107 = vmatprep.subr.mxu0 0.0
  %108 = vmatpush1.xpose.msra.mxu0 %v69
  %109 = vmatprep.subr.mxu0 0.0
  %110 = vmatpush1.xpose.msra.mxu0 %v72
  %111 = vmatprep.subr.mxu0 0.0
  %112 = vmatpush1.xpose.msra.mxu0 %v75
  %113 = vmatprep.subr.mxu0 0.0
  %114 = vmatpush1.xpose.msra.mxu0 %v78
  %115 = vmatprep.subr.mxu0 0.0
  %116 = vmatpush1.xpose.msra.mxu0 %v81
  %117 = vmatprep.subr.mxu0 0.0
  %118 = vmatpush1.xpose.msra.mxu0 %v84
  %119 = vmatprep.subr.mxu0 0.0
  %120 = vmatpush1.xpose.msra.mxu0 %v87
  %121 = vmatprep.subr.mxu0 0.0
  %122 = vmatpush1.xpose.msra.mxu0 0.0
  %123 = vmatprep.subr.mxu0 0.0
  %124 = vmatpush1.xpose.msra.mxu0 0.0
  %125 = vmatprep.subr.mxu0 0.0
  %126 = vmatpush1.xpose.msra.mxu0 0.0
  %127 = vmatprep.subr.mxu0 0.0
  %128 = vmatpush1.xpose.msra.mxu0 0.0
  %129 = vmatprep.subr.mxu0 0.0
  %130 = vmatpush1.xpose.msra.mxu0 0.0
  %131 = vmatprep.subr.mxu0 0.0
  %132 = vmatpush1.xpose.msra.mxu0 0.0
  %133 = vmatprep.subr.mxu0 0.0
  %134 = vmatpush1.xpose.msra.mxu0 0.0
  %135 = vmatprep.subr.mxu0 0.0
  %136 = vmatpush1.xpose.msra.mxu0 0.0
  %137 = vmatprep.subr.mxu0 0.0
  %138 = vmatpush1.xpose.msra.mxu0 0.0
  %139 = vmatprep.subr.mxu0 0.0
  %140 = vmatpush1.xpose.msra.mxu0 0.0
  %141 = vmatprep.subr.mxu0 0.0
  %142 = vmatpush1.xpose.msra.mxu0 0.0
  %143 = vmatprep.subr.mxu0 0.0
  %144 = vmatpush1.xpose.msra.mxu0 0.0
  %145 = vmatprep.subr.mxu0 0.0
  %146 = vmatpush1.xpose.msra.mxu0 0.0
  %147 = vmatprep.subr.mxu0 0.0
  %148 = vmatpush1.xpose.msra.mxu0 0.0
  %149 = vmatprep.subr.mxu0 0.0
  %150 = vmatpush1.xpose.msra.mxu0 0.0
  %151 = vmatprep.subr.mxu0 0.0
  %152 = vmatpush1.xpose.msra.mxu0 0.0
  %153 = vmatprep.mubr.f32.mxu0 0.0
  %154 = vmatmul.mubr.f32.gmra.mrb[0].mxu0 %v39
  %v155 = vpop.f32.mrb[0].mxu0
  %v156 = vadd.f32 %v35, %v155
  %v157 = vpop.f32.mrb[0].mxu0
  %158 = vdwg.mxu0
  %159 = vst [vmem:[%s3] sm:$0xff] %v156
  // Predicated region
  $region14: #{diag_gaussian_forward.1} parent=0 // pred_check
    _
  $region15: #{diag_gaussian_forward.1} parent=0 // pred_check_branch
    %161 = sbr.rel (0) target = $region17
  $region16: #{diag_gaussian_forward.1} parent=0 // pred_region
    _
  $region17: #{diag_gaussian_forward.1} parent=0 // pred_fallthru
    _
  // Predicated region
  $region18: #{diag_gaussian_forward.1} parent=0 // pred_check
    _
  $region19: #{diag_gaussian_forward.1} parent=0 // pred_check_branch
    %163 = sbr.rel (0) target = $region21
  $region20: #{diag_gaussian_forward.1} parent=0 // pred_region
    _
  $region21: #{diag_gaussian_forward.1} parent=0 // pred_fallthru
    _

</llo_original>
